<compile_context>
chip_gen: v7x
topology: tpu7x:2x2x1
jax: 0.10.0
libtpu: 0.0.40
codegen_flags: <defaults>
</compile_context>

<pallas_src>
import functools

import jax
import jax.numpy as jnp
import numpy as np
from jax.experimental import pallas as pl
from jax.experimental.pallas import tpu as pltpu


def _masked_l1_partial_kernel(*refs, weights, min_disp, max_disp, compute_dtype):
    """refs = (gt_ref, est_ref_0 .. est_ref_{n-1}, wabs_out_ref, cnt_out_ref).

    Per row-tile partial sums:
      wabs = sum_i w_i * sum(|est_i - gt| * mask)   (over this tile)
      cnt  = sum(mask)                              (over this tile)
    Only two cross-lane reductions per tile; everything else is VALU work.
    """
    n = len(weights)
    gt_ref = refs[0]
    est_refs = refs[1:1 + n]
    wabs_ref = refs[1 + n]
    cnt_ref = refs[2 + n]

    gt = gt_ref[...].astype(compute_dtype)                       # (TR, C)
    lo = jnp.asarray(min_disp, compute_dtype)
    hi = jnp.asarray(max_disp, compute_dtype)
    maskf = ((gt > lo) & (gt < hi)).astype(jnp.float32)

    # Single elementwise accumulator across all N prediction streams, then one
    # masked reduction (instead of N+1 full-tile reductions).
    acc = jnp.zeros(gt.shape, jnp.float32)
    for est_ref, w in zip(est_refs, weights):                    # unrolled
        d = jnp.abs(est_ref[...].astype(compute_dtype) - gt)     # bf16 or f32
        acc = acc + jnp.float32(w) * d.astype(jnp.float32)

    wabs = jnp.sum(acc * maskf)
    cnt = jnp.sum(maskf)

    wabs_ref[...] = jnp.full(wabs_ref.shape, wabs, jnp.float32)
    cnt_ref[...] = jnp.full(cnt_ref.shape, cnt, jnp.float32)


def _vmem_capacity_bytes():
    """Physical VMEM of the current generation; conservative fallback."""
    try:
        cap = getattr(pltpu.get_tpu_info(), "vmem_capacity_bytes", None)
        if cap:
            return int(cap)
    except Exception:
        pass
    return 64 << 20   # v7x-sized fallback: safe on every generation


def _round_down_8(x):
    return max(8, (int(x) // 8) * 8)


def _choose_row_tile(R, bytes_per_row_db, vmem_cap):
    """Row tile that (a) is a multiple of 8, (b) keeps the grid >= ~4 steps,
    (c) prefers >= 512 rows when R allows, (d) keeps double-buffered inputs
    inside a generation-aware VMEM budget (~42% of physical VMEM; up to ~75%
    only on 128-MiB parts so heavy-stream cases stay at the 512-row sweet
    spot without leaking a too-big budget onto v7x's 64 MiB)."""
    budget = int(0.42 * vmem_cap)
    hi = _round_down_8(max(R // 4, 8))            # >= ~4 grid steps
    lo = min(512, hi)                             # HBM-roofline sweet spot
    tr = _round_down_8(min(budget // max(bytes_per_row_db, 1), hi))
    if tr < lo and vmem_cap >= (100 << 20):       # 128-MiB parts only
        big_budget = int(0.75 * vmem_cap)
        tr = max(tr, _round_down_8(
            min(big_budget // max(bytes_per_row_db, 1), lo)))
    return max(8, tr)


def masked_weighted_l1(disp_ests, disp_gt, weights, min_disp, max_disp):
    """disp_ests: list of N arrays with the same shape as disp_gt (any float
    dtype); returns the weighted masked-L1 loss (0 if mask mean < 0.25)."""
    n = len(disp_ests)
    C = int(disp_gt.shape[-1])
    R = int(np.prod(disp_gt.shape[:-1]))

    gt2d = disp_gt.reshape(R, C)                     # layout-only reshape
    ests2d = [e.reshape(R, C) for e in disp_ests]    # keep native dtypes

    # Exact per-stream byte accounting (gt + each est), double-buffered.
    bytes_per_row_db = 2 * C * (jnp.dtype(gt2d.dtype).itemsize
                                + sum(jnp.dtype(e.dtype).itemsize for e in ests2d))
    vmem_cap = _vmem_capacity_bytes()
    tr = _choose_row_tile(R, bytes_per_row_db, vmem_cap)

    # Prefer a nearby multiple-of-8 divisor of R (no padding); otherwise pad
    # rows up to a multiple of tr with mask==0 filler (never fall back to a
    # whole-array block).
    divisor = None
    t = tr
    while t >= max(8, tr // 2):
        if R % t == 0:
            divisor = t
            break
        t -= 8
    if divisor is not None:
        tr = divisor
        R_pad = R
    else:
        R_pad = ((R + tr - 1) // tr) * tr

    if R_pad > R:
        pad_rows = R_pad - R
        # gt padded with min_disp: strict '>' comparison -> mask False there,
        # so padded rows contribute nothing to either partial.
        gt_pad = jnp.full((pad_rows, C), min_disp, dtype=gt2d.dtype)
        gt2d = jnp.concatenate([gt2d, gt_pad], axis=0)
        ests2d = [jnp.concatenate([e, jnp.zeros((pad_rows, C), e.dtype)], axis=0)
                  for e in ests2d]

    num_tiles = R_pad // tr

    all_bf16 = all(a.dtype == jnp.bfloat16 for a in [gt2d, *ests2d])
    compute_dtype = jnp.bfloat16 if all_bf16 else jnp.float32

    kernel = functools.partial(
        _masked_l1_partial_kernel,
        weights=tuple(float(w) for w in weights),
        min_disp=float(min_disp),
        max_disp=float(max_disp),
        compute_dtype=compute_dtype,
    )

    in_specs = [pl.BlockSpec((tr, C), lambda r: (r, 0)) for _ in range(n + 1)]
    out_specs = [pl.BlockSpec((1, 8, 128), lambda r: (r, 0, 0)),
                 pl.BlockSpec((1, 8, 128), lambda r: (r, 0, 0))]
    out_shape = [jax.ShapeDtypeStruct((num_tiles, 8, 128), jnp.float32),
                 jax.ShapeDtypeStruct((num_tiles, 8, 128), jnp.float32)]

    bytes_in = sum(int(np.prod(a.shape)) * jnp.dtype(a.dtype).itemsize
                   for a in [gt2d, *ests2d])
    cost = pl.CostEstimate(
        flops=(5 * n + 5) * R_pad * C,
        transcendentals=0,
        bytes_accessed=bytes_in + 2 * num_tiles * 8 * 128 * 4,
    )

    input_block_bytes = tr * bytes_per_row_db          # all streams, double-buffered
    vmem_limit = int(min(vmem_cap - (8 << 20),
                         max(32 << 20, input_block_bytes + (16 << 20))))

    wabs_p, cnt_p = pl.pallas_call(
        kernel,
        out_shape=out_shape,
        grid=(num_tiles,),
        in_specs=in_specs,
        out_specs=out_specs,
        compiler_params=pltpu.CompilerParams(
            dimension_semantics=("parallel",),
            vmem_limit_bytes=vmem_limit),
        cost_estimate=cost,
    )(gt2d, *ests2d)

    wabs_total = jnp.sum(wabs_p[:, 0, 0])
    cnt_total = jnp.sum(cnt_p[:, 0, 0])
    mask_mean = cnt_total / jnp.float32(R * C)         # original (unpadded) count
    # Early-exit branch of model_loss (0.0 * est0.mean()) is exactly 0 in the
    # forward pass; guard count==0 so the unselected branch never produces NaN.
    loss = jnp.where(mask_mean < 0.25,
                     jnp.float32(0.0),
                     wabs_total / jnp.maximum(cnt_total, jnp.float32(1.0)))
    return loss


def loss_func_forward(data_batch, training_output, config):
    """JAX/Pallas equivalent of loss_func.forward."""
    max_disp = config['model']['max_disp']
    min_disp = config['model']['min_disp']

    disp_true = data_batch['gt1']                    # keep native dtype (bf16 ok)
    ests = training_output['training_output']        # list of (B, H, W)
    n = len(ests)

    loss_gamma = 0.9
    if n > 1:
        adjusted = loss_gamma ** (15.0 / (n - 1))
        weights = [adjusted ** (n - i - 1) for i in range(n)]
    else:
        weights = [1.0]

    loss = masked_weighted_l1(ests, disp_true, weights, min_disp, max_disp)

    # TODO(synk): 'init_cost_volume' branch requires stereo_infoNCE, which is
    # not defined in the reference source; omitted.
    if 'recon_loss' in training_output:
        loss = loss + jnp.asarray(training_output['recon_loss'], jnp.float32)
    return loss


def _reference_loss(data_batch, training_output, config):
    """Pure-jnp reference matching the PyTorch semantics."""
    max_disp = config['model']['max_disp']
    min_disp = config['model']['min_disp']
    gt = data_batch['gt1'].astype(jnp.float32)
    mask = (gt > min_disp) & (gt < max_disp)
    ests = training_output['training_output']
    n = len(ests)
    if float(jnp.mean(mask.astype(jnp.float32))) < 0.25:
        loss = jnp.float32(0.0)
    else:
        adjusted = 0.9 ** (15.0 / (n - 1)) if n > 1 else 1.0
        weights = [adjusted ** (n - i - 1) for i in range(n)]
        maskf = mask.astype(jnp.float32)
        cnt = jnp.sum(maskf)
        loss = jnp.float32(0.0)
        for e, w in zip(ests, weights):
            loss = loss + w * jnp.sum(
                jnp.abs(e.astype(jnp.float32) - gt) * maskf) / cnt
    if 'recon_loss' in training_output:
        loss = loss + jnp.asarray(training_output['recon_loss'], jnp.float32)
    return loss


if __name__ == "__main__":
    key = jax.random.PRNGKey(0)
    B, H, W = 2, 16, 16
    N_PRED = 4

    config = {'model': {'max_disp': 60.0, 'min_disp': 0.5}}

    k_gt, k_noise = jax.random.split(key, 2)
    gt = jax.random.uniform(k_gt, (B, H, W), jnp.float32, minval=0.0, maxval=64.0)
    noise = jax.random.normal(k_noise, (N_PRED, B, H, W), jnp.float32)
    disp_ests = [gt + 0.5 * (i + 1) * noise[i] for i in range(N_PRED)]
    recon_loss = jnp.float32(0.123)

    # f32 path (exact match against the pure-jnp reference).
    data_batch = {'gt1': gt}
    training_output = {'training_output': disp_ests, 'recon_loss': recon_loss}
    loss = jax.block_until_ready(loss_func_forward(data_batch, training_output, config))
    ref = _reference_loss(data_batch, training_output, config)
    np.testing.assert_allclose(np.asarray(loss), np.asarray(ref), rtol=1e-5, atol=1e-5)

    # bf16 end-to-end path (native-width streaming; sub/abs in bf16, f32 accum).
    data_bf16 = {'gt1': gt.astype(jnp.bfloat16)}
    out_bf16 = {'training_output': [e.astype(jnp.bfloat16) for e in disp_ests],
                'recon_loss': recon_loss}
    loss_bf16 = jax.block_until_ready(loss_func_forward(data_bf16, out_bf16, config))
    ref_bf16 = _reference_loss(data_bf16, out_bf16, config)
    np.testing.assert_allclose(np.asarray(loss_bf16), np.asarray(ref_bf16),
                               rtol=5e-2, atol=5e-2)

    print("KERNEL_OK")
</pallas_src>

<mosaic_0001>
module attributes {stable_mosaic.version = 11 : i64} {
  func.func @_masked_l1_partial_kernel(%arg0: i32, %arg1: memref<8x16xf32, #tpu.memory_space<vmem>>, %arg2: memref<8x16xf32, #tpu.memory_space<vmem>>, %arg3: memref<8x16xf32, #tpu.memory_space<vmem>>, %arg4: memref<8x16xf32, #tpu.memory_space<vmem>>, %arg5: memref<8x16xf32, #tpu.memory_space<vmem>>, %arg6: memref<1x8x128xf32, #tpu.memory_space<vmem>>, %arg7: memref<1x8x128xf32, #tpu.memory_space<vmem>>) attributes {dimension_semantics = [#tpu.dimension_semantics<parallel>], iteration_bounds = array<i64: 4>, scalar_prefetch = 0 : i64, scratch_operands = 0 : i64, tpu.core_type = #tpu.core_type<tc>, window_params = [{transform_indices = @transform_0, window_bounds = array<i64: 8, 16>}, {transform_indices = @transform_1, window_bounds = array<i64: 8, 16>}, {transform_indices = @transform_2, window_bounds = array<i64: 8, 16>}, {transform_indices = @transform_3, window_bounds = array<i64: 8, 16>}, {transform_indices = @transform_4, window_bounds = array<i64: 8, 16>}, {transform_indices = @transform_5, window_bounds = array<i64: 1, 8, 128>}, {transform_indices = @transform_6, window_bounds = array<i64: 1, 8, 128>}]} {
    %c0 = arith.constant 0 : index
    %c0_0 = arith.constant 0 : index
    %0 = vector.load %arg1[%c0, %c0_0] : memref<8x16xf32, #tpu.memory_space<vmem>>, vector<8x16xf32>
    %cst = arith.constant 5.000000e-01 : f32
    %1 = vector.broadcast %cst : f32 to vector<8x16xf32>
    %2 = arith.cmpf ogt, %0, %1 : vector<8x16xf32>
    %cst_1 = arith.constant 6.000000e+01 : f32
    %3 = vector.broadcast %cst_1 : f32 to vector<8x16xf32>
    %4 = arith.cmpf olt, %0, %3 : vector<8x16xf32>
    %5 = arith.andi %2, %4 : vector<8x16xi1>
    %6 = arith.extui %5 : vector<8x16xi1> to vector<8x16xi32>
    %7 = arith.sitofp %6 : vector<8x16xi32> to vector<8x16xf32>
    %cst_2 = arith.constant 0.000000e+00 : f32
    %8 = vector.broadcast %cst_2 : f32 to vector<8x16xf32>
    %c0_3 = arith.constant 0 : index
    %c0_4 = arith.constant 0 : index
    %9 = vector.load %arg2[%c0_3, %c0_4] : memref<8x16xf32, #tpu.memory_space<vmem>>, vector<8x16xf32>
    %10 = arith.subf %9, %0 : vector<8x16xf32>
    %11 = math.absf %10 : vector<8x16xf32>
    %cst_5 = arith.constant 0.205891132 : f32
    %12 = vector.broadcast %cst_5 : f32 to vector<8x16xf32>
    %13 = arith.mulf %12, %11 : vector<8x16xf32>
    %14 = arith.addf %8, %13 : vector<8x16xf32>
    %c0_6 = arith.constant 0 : index
    %c0_7 = arith.constant 0 : index
    %15 = vector.load %arg3[%c0_6, %c0_7] : memref<8x16xf32, #tpu.memory_space<vmem>>, vector<8x16xf32>
    %16 = arith.subf %15, %0 : vector<8x16xf32>
    %17 = math.absf %16 : vector<8x16xf32>
    %cst_8 = arith.constant 0.34867844 : f32
    %18 = vector.broadcast %cst_8 : f32 to vector<8x16xf32>
    %19 = arith.mulf %18, %17 : vector<8x16xf32>
    %20 = arith.addf %14, %19 : vector<8x16xf32>
    %c0_9 = arith.constant 0 : index
    %c0_10 = arith.constant 0 : index
    %21 = vector.load %arg4[%c0_9, %c0_10] : memref<8x16xf32, #tpu.memory_space<vmem>>, vector<8x16xf32>
    %22 = arith.subf %21, %0 : vector<8x16xf32>
    %23 = math.absf %22 : vector<8x16xf32>
    %cst_11 = arith.constant 5.904900e-01 : f32
    %24 = vector.broadcast %cst_11 : f32 to vector<8x16xf32>
    %25 = arith.mulf %24, %23 : vector<8x16xf32>
    %26 = arith.addf %20, %25 : vector<8x16xf32>
    %c0_12 = arith.constant 0 : index
    %c0_13 = arith.constant 0 : index
    %27 = vector.load %arg5[%c0_12, %c0_13] : memref<8x16xf32, #tpu.memory_space<vmem>>, vector<8x16xf32>
    %28 = arith.subf %27, %0 : vector<8x16xf32>
    %29 = math.absf %28 : vector<8x16xf32>
    %cst_14 = arith.constant 1.000000e+00 : f32
    %30 = vector.broadcast %cst_14 : f32 to vector<8x16xf32>
    %31 = arith.mulf %30, %29 : vector<8x16xf32>
    %32 = arith.addf %26, %31 : vector<8x16xf32>
    %33 = arith.mulf %32, %7 : vector<8x16xf32>
    %34 = vector.shape_cast %33 : vector<8x16xf32> to vector<1x8x16xf32>
    %cst_15 = arith.constant dense<0.000000e+00> : vector<1xf32>
    %35 = vector.multi_reduction <add>, %34, %cst_15 [1, 2] : vector<1x8x16xf32> to vector<1xf32>
    %36 = vector.shape_cast %35 : vector<1xf32> to vector<1x1x1xf32>
    %37 = vector.extract %36[0, 0, 0] : f32 from vector<1x1x1xf32>
    %38 = vector.shape_cast %7 : vector<8x16xf32> to vector<1x8x16xf32>
    %cst_16 = arith.constant dense<0.000000e+00> : vector<1xf32>
    %39 = vector.multi_reduction <add>, %38, %cst_16 [1, 2] : vector<1x8x16xf32> to vector<1xf32>
    %40 = vector.shape_cast %39 : vector<1xf32> to vector<1x1x1xf32>
    %41 = vector.extract %40[0, 0, 0] : f32 from vector<1x1x1xf32>
    %42 = vector.broadcast %37 : f32 to vector<1x8x128xf32>
    %c0_17 = arith.constant 0 : index
    %c0_18 = arith.constant 0 : index
    %c0_19 = arith.constant 0 : index
    %43 = vector.load %arg6[%c0_17, %c0_18, %c0_19] : memref<1x8x128xf32, #tpu.memory_space<vmem>>, vector<1x8x128xf32>
    tpu.vector_store %arg6[%c0_17, %c0_18, %c0_19], %42 {strides = array<i32>} : memref<1x8x128xf32, #tpu.memory_space<vmem>>, vector<1x8x128xf32>,
    %44 = vector.broadcast %41 : f32 to vector<1x8x128xf32>
    %c0_20 = arith.constant 0 : index
    %c0_21 = arith.constant 0 : index
    %c0_22 = arith.constant 0 : index
    %45 = vector.load %arg7[%c0_20, %c0_21, %c0_22] : memref<1x8x128xf32, #tpu.memory_space<vmem>>, vector<1x8x128xf32>
    tpu.vector_store %arg7[%c0_20, %c0_21, %c0_22], %44 {strides = array<i32>} : memref<1x8x128xf32, #tpu.memory_space<vmem>>, vector<1x8x128xf32>,
    return
  }
  func.func @transform_0(%arg0: i32) -> (i32, i32) {
    %c0_i32 = arith.constant 0 : i32
    %c0_i32_0 = arith.constant 0 : i32
    return %arg0, %c0_i32 : i32, i32
  }
  func.func @transform_1(%arg0: i32) -> (i32, i32) {
    %c0_i32 = arith.constant 0 : i32
    %c0_i32_0 = arith.constant 0 : i32
    return %arg0, %c0_i32 : i32, i32
  }
  func.func @transform_2(%arg0: i32) -> (i32, i32) {
    %c0_i32 = arith.constant 0 : i32
    %c0_i32_0 = arith.constant 0 : i32
    return %arg0, %c0_i32 : i32, i32
  }
  func.func @transform_3(%arg0: i32) -> (i32, i32) {
    %c0_i32 = arith.constant 0 : i32
    %c0_i32_0 = arith.constant 0 : i32
    return %arg0, %c0_i32 : i32, i32
  }
  func.func @transform_4(%arg0: i32) -> (i32, i32) {
    %c0_i32 = arith.constant 0 : i32
    %c0_i32_0 = arith.constant 0 : i32
    return %arg0, %c0_i32 : i32, i32
  }
  func.func @transform_5(%arg0: i32) -> (i32, i32, i32) {
    %c0_i32 = arith.constant 0 : i32
    %c0_i32_0 = arith.constant 0 : i32
    %c0_i32_1 = arith.constant 0 : i32
    return %arg0, %c0_i32, %c0_i32_0 : i32, i32, i32
  }
  func.func @transform_6(%arg0: i32) -> (i32, i32, i32) {
    %c0_i32 = arith.constant 0 : i32
    %c0_i32_0 = arith.constant 0 : i32
    %c0_i32_1 = arith.constant 0 : i32
    return %arg0, %c0_i32, %c0_i32_0 : i32, i32, i32
  }
}

</mosaic_0001>

<llo_original>
// kernel: tpu_custom_call.1
$region0: #{tpu_custom_call.1}
  #allocation0 [shape = 'u32[]', space=smem, size = 0x4, offset = 0x4, fixed_abs, tag = 'smem constant byte address 0x4 - core index']
  #allocation1 [shape = 'u32[144,128]{1,0:T(1,128)}', space=vmem, size = 0x12000, scoped, tag = 'internal scratch']
  %s0 = inlined_call_operand.vmem [shape: f32[32,16], index: 0, kind: input, shape index: {}]
  %s1 = inlined_call_operand.vmem [shape: f32[32,16], index: 1, kind: input, shape index: {}]
  %s2 = inlined_call_operand.vmem [shape: f32[32,16], index: 2, kind: input, shape index: {}]
  %s3 = inlined_call_operand.vmem [shape: f32[32,16], index: 3, kind: input, shape index: {}]
  %s4 = inlined_call_operand.vmem [shape: f32[32,16], index: 4, kind: input, shape index: {}]
  %s5 = inlined_call_operand.hbm [shape: f32[4,8,128], index: 5, kind: output, shape index: {0}]
  %s6 = inlined_call_operand.hbm [shape: f32[4,8,128], index: 6, kind: output, shape index: {1}]
  %7 = xla_tuple %s5, %s6
  %s8 = sld [smem:[#allocation0]]
  $region61: #{tpu_custom_call.1} parent=0
    _
  %s10 = ssub.s32 1, %s8
  %s11 = scalar_select 0, %s10, %s8
  $region1: #{tpu_custom_call.1} parent=0
    #allocation2 [shape = 'u8[8192]{0}', space=vmem, size = 0x2000, scoped, tag = 'output window, operand 0']
    #allocation3 [shape = 's32[2]{0}', space=sflag, size = 0x8, scoped, tag = 'scoped memory for tpu_custom_call.1']
    #allocation4 [shape = 'u8[8192]{0}', space=vmem, size = 0x2000, scoped, tag = 'output window, operand 1']
    #allocation5 [shape = 's32[2]{0}', space=sflag, size = 0x8, scoped, tag = 'scoped memory for tpu_custom_call.1']
    %12 = vsyncpa [#allocation3], 0
    %s13 = scalar_lea.sflag [#allocation3], 1
    %14 = vsyncpa %s13, 0
    %15 = vsyncpa [#allocation5], 0
    %s16 = scalar_lea.sflag [#allocation5], 1
    %17 = vsyncpa %s16, 0
    loop: start=0, step=1, limit=6
    $region2: #{tpu_custom_call.1} parent=1 // loop_pre_header
      _
    $region3: #{tpu_custom_call.1} parent=1 // loop_header
      %s19 = sphi 0, %s23
      %p20 = scmp.ge.s32.totalorder %s19, 6
      %s29 = sphi 0, %s31
      %s32 = sphi 0, %s29
      %s33 = sphi 0, %s32
      %s49 = sphi 0, %s33
      %s55 = sphi 0, %s57
      %s58 = sphi 0, %s55
      %s59 = sphi 0, %s58
      %s75 = sphi 0, %s59
      %s81 = sphi 0, %s83
      %s84 = sphi 0, %s81
      %s85 = sphi 0, %s84
      %s101 = sphi 0, %s85
      %s107 = sphi 0, %s109
      %s110 = sphi 0, %s107
      %s111 = sphi 0, %s110
      %s127 = sphi 0, %s111
      %s133 = sphi 0, %s135
      %s136 = sphi 0, %s133
      %s137 = sphi 0, %s136
      %s153 = sphi 0, %s137
      %s159 = sphi 0, %s161
      %s162 = sphi 0, %s159
      %s163 = sphi 0, %s162
      %s179 = sphi 0, %s163
      %s185 = sphi 0, %s187
      %s188 = sphi 0, %s185
      %s189 = sphi 0, %s188
      %s205 = sphi 0, %s189
    $region4: #{tpu_custom_call.1} parent=1 // loop_header_branch
      %22 = sbr.rel (%p20) target = $region8
    $region5: #{tpu_custom_call.1} parent=1 // loop_body
      %s24 = ssub.s32 %s19, 1
      %s25 = ssub.s32 %s19, 2
      %s26 = sadd.s32 %s19, 1
      %s27 = ssub.s32 %s19, %s26
      %p28 = scmp.eq.s32.totalorder %s27, 0
      %s30 = sadd.s32 %s29, 1
      %s31 = scalar_select %p28, %s29, %s30
      %p34 = pneg %p28
      %p35 = scmp.eq.s32.totalorder %s19, 3
      %p36 = por %p34, %p35
      %p37 = scmp.ne.s32.totalorder %s29, %s32
      %p38 = scmp.eq.s32.totalorder %s19, 0
      %p39 = por %p37, %p38
      %p40 = scmp.ne.s32.totalorder %s29, %s32
      %p41 = scmp.eq.s32.totalorder %s24, 3
      %p42 = por %p40, %p41
      %p43 = scmp.ne.s32.totalorder %s32, %s33
      %p44 = scmp.eq.s32.totalorder %s24, 0
      %p45 = por %p43, %p44
      %p46 = scmp.ne.s32.totalorder %s32, %s33
      %p47 = scmp.eq.s32.totalorder %s25, 3
      %p48 = por %p46, %p47
      %p50 = scmp.ne.s32.totalorder %s33, %s49
      %p51 = scmp.eq.s32.totalorder %s25, 0
      %p52 = por %p50, %p51
      %s53 = ssub.s32 %s19, %s26
      %p54 = scmp.eq.s32.totalorder %s53, 0
      %s56 = sadd.s32 %s55, 1
      %s57 = scalar_select %p54, %s55, %s56
      %p60 = pneg %p54
      %p61 = scmp.eq.s32.totalorder %s19, 3
      %p62 = por %p60, %p61
      %p63 = scmp.ne.s32.totalorder %s55, %s58
      %p64 = scmp.eq.s32.totalorder %s19, 0
      %p65 = por %p63, %p64
      %p66 = scmp.ne.s32.totalorder %s55, %s58
      %p67 = scmp.eq.s32.totalorder %s24, 3
      %p68 = por %p66, %p67
      %p69 = scmp.ne.s32.totalorder %s58, %s59
      %p70 = scmp.eq.s32.totalorder %s24, 0
      %p71 = por %p69, %p70
      %p72 = scmp.ne.s32.totalorder %s58, %s59
      %p73 = scmp.eq.s32.totalorder %s25, 3
      %p74 = por %p72, %p73
      %p76 = scmp.ne.s32.totalorder %s59, %s75
      %p77 = scmp.eq.s32.totalorder %s25, 0
      %p78 = por %p76, %p77
      %s79 = ssub.s32 %s19, %s26
      %p80 = scmp.eq.s32.totalorder %s79, 0
      %s82 = sadd.s32 %s81, 1
      %s83 = scalar_select %p80, %s81, %s82
      %p86 = pneg %p80
      %p87 = scmp.eq.s32.totalorder %s19, 3
      %p88 = por %p86, %p87
      %p89 = scmp.ne.s32.totalorder %s81, %s84
      %p90 = scmp.eq.s32.totalorder %s19, 0
      %p91 = por %p89, %p90
      %p92 = scmp.ne.s32.totalorder %s81, %s84
      %p93 = scmp.eq.s32.totalorder %s24, 3
      %p94 = por %p92, %p93
      %p95 = scmp.ne.s32.totalorder %s84, %s85
      %p96 = scmp.eq.s32.totalorder %s24, 0
      %p97 = por %p95, %p96
      %p98 = scmp.ne.s32.totalorder %s84, %s85
      %p99 = scmp.eq.s32.totalorder %s25, 3
      %p100 = por %p98, %p99
      %p102 = scmp.ne.s32.totalorder %s85, %s101
      %p103 = scmp.eq.s32.totalorder %s25, 0
      %p104 = por %p102, %p103
      %s105 = ssub.s32 %s19, %s26
      %p106 = scmp.eq.s32.totalorder %s105, 0
      %s108 = sadd.s32 %s107, 1
      %s109 = scalar_select %p106, %s107, %s108
      %p112 = pneg %p106
      %p113 = scmp.eq.s32.totalorder %s19, 3
      %p114 = por %p112, %p113
      %p115 = scmp.ne.s32.totalorder %s107, %s110
      %p116 = scmp.eq.s32.totalorder %s19, 0
      %p117 = por %p115, %p116
      %p118 = scmp.ne.s32.totalorder %s107, %s110
      %p119 = scmp.eq.s32.totalorder %s24, 3
      %p120 = por %p118, %p119
      %p121 = scmp.ne.s32.totalorder %s110, %s111
      %p122 = scmp.eq.s32.totalorder %s24, 0
      %p123 = por %p121, %p122
      %p124 = scmp.ne.s32.totalorder %s110, %s111
      %p125 = scmp.eq.s32.totalorder %s25, 3
      %p126 = por %p124, %p125
      %p128 = scmp.ne.s32.totalorder %s111, %s127
      %p129 = scmp.eq.s32.totalorder %s25, 0
      %p130 = por %p128, %p129
      %s131 = ssub.s32 %s19, %s26
      %p132 = scmp.eq.s32.totalorder %s131, 0
      %s134 = sadd.s32 %s133, 1
      %s135 = scalar_select %p132, %s133, %s134
      %p138 = pneg %p132
      %p139 = scmp.eq.s32.totalorder %s19, 3
      %p140 = por %p138, %p139
      %p141 = scmp.ne.s32.totalorder %s133, %s136
      %p142 = scmp.eq.s32.totalorder %s19, 0
      %p143 = por %p141, %p142
      %p144 = scmp.ne.s32.totalorder %s133, %s136
      %p145 = scmp.eq.s32.totalorder %s24, 3
      %p146 = por %p144, %p145
      %p147 = scmp.ne.s32.totalorder %s136, %s137
      %p148 = scmp.eq.s32.totalorder %s24, 0
      %p149 = por %p147, %p148
      %p150 = scmp.ne.s32.totalorder %s136, %s137
      %p151 = scmp.eq.s32.totalorder %s25, 3
      %p152 = por %p150, %p151
      %p154 = scmp.ne.s32.totalorder %s137, %s153
      %p155 = scmp.eq.s32.totalorder %s25, 0
      %p156 = por %p154, %p155
      %s157 = ssub.s32 %s19, %s26
      %p158 = scmp.eq.s32.totalorder %s157, 0
      %s160 = sadd.s32 %s159, 1
      %s161 = scalar_select %p158, %s159, %s160
      %p164 = pneg %p158
      %p165 = scmp.eq.s32.totalorder %s19, 3
      %p166 = por %p164, %p165
      %p167 = scmp.ne.s32.totalorder %s159, %s162
      %p168 = scmp.eq.s32.totalorder %s19, 0
      %p169 = por %p167, %p168
      %p170 = scmp.ne.s32.totalorder %s159, %s162
      %p171 = scmp.eq.s32.totalorder %s24, 3
      %p172 = por %p170, %p171
      %p173 = scmp.ne.s32.totalorder %s162, %s163
      %p174 = scmp.eq.s32.totalorder %s24, 0
      %p175 = por %p173, %p174
      %p176 = scmp.ne.s32.totalorder %s162, %s163
      %p177 = scmp.eq.s32.totalorder %s25, 3
      %p178 = por %p176, %p177
      %p180 = scmp.ne.s32.totalorder %s163, %s179
      %p181 = scmp.eq.s32.totalorder %s25, 0
      %p182 = por %p180, %p181
      %s183 = ssub.s32 %s19, %s26
      %p184 = scmp.eq.s32.totalorder %s183, 0
      %s186 = sadd.s32 %s185, 1
      %s187 = scalar_select %p184, %s185, %s186
      %p190 = pneg %p184
      %p191 = scmp.eq.s32.totalorder %s19, 3
      %p192 = por %p190, %p191
      %p193 = scmp.ne.s32.totalorder %s185, %s188
      %p194 = scmp.eq.s32.totalorder %s19, 0
      %p195 = por %p193, %p194
      %p196 = scmp.ne.s32.totalorder %s185, %s188
      %p197 = scmp.eq.s32.totalorder %s24, 3
      %p198 = por %p196, %p197
      %p199 = scmp.ne.s32.totalorder %s188, %s189
      %p200 = scmp.eq.s32.totalorder %s24, 0
      %p201 = por %p199, %p200
      %p202 = scmp.ne.s32.totalorder %s188, %s189
      %p203 = scmp.eq.s32.totalorder %s25, 3
      %p204 = por %p202, %p203
      %p206 = scmp.ne.s32.totalorder %s189, %s205
      %p207 = scmp.eq.s32.totalorder %s25, 0
      %p208 = por %p206, %p207
      %p209 = scmp.le.s32.totalorder 1, %s19
      %p210 = scmp.lt.s32.totalorder %s19, 5
      %p211 = pnand %p209, %p210
      %p212 = pneg %p211
      // Predicated region
      $region9: #{tpu_custom_call.1} parent=5 // pred_check
        _
      $region10: #{tpu_custom_call.1} parent=5 // pred_check_branch
        %214 = sbr.rel (%p211) target = $region12
      $region11: #{tpu_custom_call.1} parent=5 // pred_region
        %s215 = ssub.s32 %s19, 1
      $region12: #{tpu_custom_call.1} parent=5 // pred_fallthru
        _
      %p216 = scmp.lt.s32.totalorder %s19, 4
      // Predicated region
      $region13: #{tpu_custom_call.1} parent=5 // pred_check
        %p217 = pneg %p216
      $region14: #{tpu_custom_call.1} parent=5 // pred_check_branch
        %219 = sbr.rel (%p217) target = $region16
      $region15: #{tpu_custom_call.1} parent=5 // pred_region
        // Predicated region
        $region17: #{tpu_custom_call.1} parent=15 // pred_check
          %p220 = pneg %p39
        $region18: #{tpu_custom_call.1} parent=15 // pred_check_branch
          %222 = sbr.rel (%p220) target = $region20
        $region19: #{tpu_custom_call.1} parent=15 // pred_region
          %p223 = scmp.lt.s32.totalorder %s19, 3
          %s224 = scalar_select %p223, %s19, 3
          %s225 = smul.addr %s224, 8
          %s226 = scalar_lea.vmem %s0, %s225
        $region20: #{tpu_custom_call.1} parent=15 // pred_fallthru
          _
        // Predicated region
        $region21: #{tpu_custom_call.1} parent=15 // pred_check
          %p227 = pneg %p65
        $region22: #{tpu_custom_call.1} parent=15 // pred_check_branch
          %229 = sbr.rel (%p227) target = $region24
        $region23: #{tpu_custom_call.1} parent=15 // pred_region
          %p230 = scmp.lt.s32.totalorder %s19, 3
          %s231 = scalar_select %p230, %s19, 3
          %s232 = smul.addr %s231, 8
          %s233 = scalar_lea.vmem %s1, %s232
        $region24: #{tpu_custom_call.1} parent=15 // pred_fallthru
          _
        // Predicated region
        $region25: #{tpu_custom_call.1} parent=15 // pred_check
          %p234 = pneg %p91
        $region26: #{tpu_custom_call.1} parent=15 // pred_check_branch
          %236 = sbr.rel (%p234) target = $region28
        $region27: #{tpu_custom_call.1} parent=15 // pred_region
          %p237 = scmp.lt.s32.totalorder %s19, 3
          %s238 = scalar_select %p237, %s19, 3
          %s239 = smul.addr %s238, 8
          %s240 = scalar_lea.vmem %s2, %s239
        $region28: #{tpu_custom_call.1} parent=15 // pred_fallthru
          _
        // Predicated region
        $region29: #{tpu_custom_call.1} parent=15 // pred_check
          %p241 = pneg %p117
        $region30: #{tpu_custom_call.1} parent=15 // pred_check_branch
          %243 = sbr.rel (%p241) target = $region32
        $region31: #{tpu_custom_call.1} parent=15 // pred_region
          %p244 = scmp.lt.s32.totalorder %s19, 3
          %s245 = scalar_select %p244, %s19, 3
          %s246 = smul.addr %s245, 8
          %s247 = scalar_lea.vmem %s3, %s246
        $region32: #{tpu_custom_call.1} parent=15 // pred_fallthru
          _
        // Predicated region
        $region33: #{tpu_custom_call.1} parent=15 // pred_check
          %p248 = pneg %p143
        $region34: #{tpu_custom_call.1} parent=15 // pred_check_branch
          %250 = sbr.rel (%p248) target = $region36
        $region35: #{tpu_custom_call.1} parent=15 // pred_region
          %p251 = scmp.lt.s32.totalorder %s19, 3
          %s252 = scalar_select %p251, %s19, 3
          %s253 = smul.addr %s252, 8
          %s254 = scalar_lea.vmem %s4, %s253
        $region36: #{tpu_custom_call.1} parent=15 // pred_fallthru
          _
      $region16: #{tpu_custom_call.1} parent=5 // pred_fallthru
        _
      %p255 = scmp.le.s32.totalorder 1, %s19
      %p256 = scmp.lt.s32.totalorder %s19, 5
      %p257 = pnand %p255, %p256
      %p258 = pneg %p257
      // Predicated region
      $region37: #{tpu_custom_call.1} parent=5 // pred_check
        _
      $region38: #{tpu_custom_call.1} parent=5 // pred_check_branch
        %260 = sbr.rel (%p257) target = $region40
      $region39: #{tpu_custom_call.1} parent=5 // pred_region
        %s261 = ssub.s32 %s19, 1
        %p262 = scmp.lt.s32.totalorder %s24, 3
        %s263 = scalar_select %p262, %s24, 3
        %s264 = smul.addr %s263, 8
        %s265 = scalar_lea.vmem %s0, %s264
        %p266 = pneg %p45
        %p267 = pneg %p42
        %p268 = scmp.lt.s32.totalorder %s24, 3
        %s269 = scalar_select %p268, %s24, 3
        %s270 = smul.addr %s269, 8
        %s271 = scalar_lea.vmem %s1, %s270
        %p272 = pneg %p71
        %p273 = pneg %p68
        %p274 = scmp.lt.s32.totalorder %s24, 3
        %s275 = scalar_select %p274, %s24, 3
        %s276 = smul.addr %s275, 8
        %s277 = scalar_lea.vmem %s2, %s276
        %p278 = pneg %p97
        %p279 = pneg %p94
        %p280 = scmp.lt.s32.totalorder %s24, 3
        %s281 = scalar_select %p280, %s24, 3
        %s282 = smul.addr %s281, 8
        %s283 = scalar_lea.vmem %s3, %s282
        %p284 = pneg %p123
        %p285 = pneg %p120
        %p286 = scmp.lt.s32.totalorder %s24, 3
        %s287 = scalar_select %p286, %s24, 3
        %s288 = smul.addr %s287, 8
        %s289 = scalar_lea.vmem %s4, %s288
        %p290 = pneg %p149
        %p291 = pneg %p146
        %p292 = pneg %p175
        %p293 = pneg %p172
        %s294 = sand.u32 %s162, 1
        %s295 = scalar_lea.sflag [#allocation3], %s294
        %s296 = sand.u32 %s162, 1
        %s297 = smul.addr %s296, 8
        %s298 = scalar_lea.vmem [#allocation2], %s297
        %p299 = pneg %p201
        %p300 = pneg %p198
        %s301 = sand.u32 %s188, 1
        %s302 = scalar_lea.sflag [#allocation5], %s301
        %s303 = sand.u32 %s188, 1
        %s304 = smul.addr %s303, 8
        %s305 = scalar_lea.vmem [#allocation4], %s304
        %p306 = scmp.lt.s32.totalorder %s24, 3
        %s307 = scalar_select %p306, %s24, 3
        %s308 = smul.addr %s307, 8
        %s309 = scalar_lea.vmem %s0, %s308
        %p310 = scmp.lt.s32.totalorder %s24, 3
        %s311 = scalar_select %p310, %s24, 3
        %s312 = smul.addr %s311, 8
        %s313 = scalar_lea.vmem %s1, %s312
        %p314 = scmp.lt.s32.totalorder %s24, 3
        %s315 = scalar_select %p314, %s24, 3
        %s316 = smul.addr %s315, 8
        %s317 = scalar_lea.vmem %s2, %s316
        %p318 = scmp.lt.s32.totalorder %s24, 3
        %s319 = scalar_select %p318, %s24, 3
        %s320 = smul.addr %s319, 8
        %s321 = scalar_lea.vmem %s3, %s320
        %p322 = scmp.lt.s32.totalorder %s24, 3
        %s323 = scalar_select %p322, %s24, 3
        %s324 = smul.addr %s323, 8
        %s325 = scalar_lea.vmem %s4, %s324
        %v326 = vld [vmem:[%s309] sm:$0xff]
        %vm327 = vcmp.gt.f32.partialorder %v326, 0.5
        %vm328 = vcmp.lt.f32.partialorder %v326, 60.0
        %vm329 = vmand %vm327, %vm328
        %v330 = vsel %vm329, 1, 0
        %v331 = vcvt.s32.f32 %v330
        %v332 = vld [vmem:[%s313] sm:$0xff]
        %v333 = vsub.f32 %v332, %v326
        %v334 = vand.u32 2147483647, %v333
        %v335 = vmul.f32 %v334, 0.20589113
        %v336 = vadd.f32 %v335, 0.0
        %v337 = vld [vmem:[%s317] sm:$0xff]
        %v338 = vsub.f32 %v337, %v326
        %v339 = vand.u32 2147483647, %v338
        %v340 = vmul.f32 %v339, 0.34867844
        %v341 = vadd.f32 %v336, %v340
        %v342 = vld [vmem:[%s321] sm:$0xff]
        %v343 = vsub.f32 %v342, %v326
        %v344 = vand.u32 2147483647, %v343
        %v345 = vmul.f32 %v344, 0.59049
        %v346 = vadd.f32 %v341, %v345
        %v347 = vld [vmem:[%s325] sm:$0xff]
        %v348 = vsub.f32 %v347, %v326
        %v349 = vand.u32 2147483647, %v348
        %v350 = vadd.f32 %v346, %v349
        %v351 = vmul.f32 %v350, %v331
        %vm352 = vcmask 130048
        %v353 = vsel %vm352, %v351, 0.0
        %354 = vadd.xlane.f32.xlu0 %v353
        %v355 = vpop.xlane.xlu0 %354
        %v356 = vrot.slane %v355, 4
        %v357 = vadd.f32 %v355, %v356
        %v358 = vrot.slane %v357, 2
        %v359 = vadd.f32 %v357, %v358
        %v360 = vrot.slane %v359, 1
        %v361 = vadd.f32 %v359, %v360
        %s362 = vtos %v361
        %v363 = vsel %vm352, %v331, 0.0
        %364 = vadd.xlane.f32.xlu0 %v363
        %v365 = vpop.xlane.xlu0 %364
        %v366 = vrot.slane %v365, 4
        %v367 = vadd.f32 %v365, %v366
        %v368 = vrot.slane %v367, 2
        %v369 = vadd.f32 %v367, %v368
        %v370 = vrot.slane %v369, 1
        %v371 = vadd.f32 %v369, %v370
        %s372 = vtos %v371
        %v373 = vstv %s362
        %374 = vst [vmem:[%s298] sm:$0xff] %v373
        %v375 = vstv %s372
        %376 = vst [vmem:[%s305] sm:$0xff] %v375
        %s377 = sand.u32 %s162, 1
        %s378 = scalar_lea.sflag [#allocation3], %s377
        %s379 = sand.u32 %s162, 1
        %s380 = smul.addr %s379, 8
        %s381 = scalar_lea.vmem [#allocation2], %s380
        %s382 = sand.u32 %s188, 1
        %s383 = scalar_lea.sflag [#allocation5], %s382
        %s384 = sand.u32 %s188, 1
        %s385 = smul.addr %s384, 8
        %s386 = scalar_lea.vmem [#allocation4], %s385
        // Predicated region
        $region41: #{tpu_custom_call.1} parent=39 // pred_check
          %p387 = pneg %p172
        $region42: #{tpu_custom_call.1} parent=39 // pred_check_branch
          %389 = sbr.rel (%p387) target = $region44
        $region43: #{tpu_custom_call.1} parent=39 // pred_region
          %s391 = ssub.s32 128, 128
          %392 = vsyncadd %s378, %s391
          %s393 = smul.addr %s24, 128
          %s394 = scalar_lea.hbm %s5, %s393
          %s396 = sshll.u32 %s381, 4
          %s397 = int_to_ptr.vmem [resolvable:$true] %s396
          %399 = dma.vmem_to_hbm [thread:$0]  %s397, 128, %s394, %s378
        $region44: #{tpu_custom_call.1} parent=39 // pred_fallthru
          _
        // Predicated region
        $region45: #{tpu_custom_call.1} parent=39 // pred_check
          %p400 = pneg %p198
        $region46: #{tpu_custom_call.1} parent=39 // pred_check_branch
          %402 = sbr.rel (%p400) target = $region48
        $region47: #{tpu_custom_call.1} parent=39 // pred_region
          %s404 = ssub.s32 128, 128
          %405 = vsyncadd %s383, %s404
          %s406 = smul.addr %s24, 128
          %s407 = scalar_lea.hbm %s6, %s406
          %s409 = sshll.u32 %s386, 4
          %s410 = int_to_ptr.vmem [resolvable:$true] %s409
          %412 = dma.vmem_to_hbm [thread:$0]  %s410, 128, %s407, %s383
        $region48: #{tpu_custom_call.1} parent=39 // pred_fallthru
          _
      $region40: #{tpu_custom_call.1} parent=5 // pred_fallthru
        _
      %p413 = scmp.le.s32.totalorder 2, %s19
      // Predicated region
      $region49: #{tpu_custom_call.1} parent=5 // pred_check
        %p414 = pneg %p413
      $region50: #{tpu_custom_call.1} parent=5 // pred_check_branch
        %416 = sbr.rel (%p414) target = $region52
      $region51: #{tpu_custom_call.1} parent=5 // pred_region
        %s417 = ssub.s32 %s19, 2
        // Predicated region
        $region53: #{tpu_custom_call.1} parent=51 // pred_check
          %p418 = pneg %p178
        $region54: #{tpu_custom_call.1} parent=51 // pred_check_branch
          %420 = sbr.rel (%p418) target = $region56
        $region55: #{tpu_custom_call.1} parent=51 // pred_region
          %s421 = sand.u32 %s163, 1
          %s422 = scalar_lea.sflag [#allocation3], %s421
          %s423 = sand.u32 %s163, 1
          %s424 = smul.addr %s423, 8
          %s425 = scalar_lea.vmem [#allocation2], %s424
          %426 = dma.done %s422, 128
        $region56: #{tpu_custom_call.1} parent=51 // pred_fallthru
          _
        // Predicated region
        $region57: #{tpu_custom_call.1} parent=51 // pred_check
          %p427 = pneg %p204
        $region58: #{tpu_custom_call.1} parent=51 // pred_check_branch
          %429 = sbr.rel (%p427) target = $region60
        $region59: #{tpu_custom_call.1} parent=51 // pred_region
          %s430 = sand.u32 %s189, 1
          %s431 = scalar_lea.sflag [#allocation5], %s430
          %s432 = sand.u32 %s189, 1
          %s433 = smul.addr %s432, 8
          %s434 = scalar_lea.vmem [#allocation4], %s433
          %435 = dma.done %s431, 128
        $region60: #{tpu_custom_call.1} parent=51 // pred_fallthru
          _
      $region52: #{tpu_custom_call.1} parent=5 // pred_fallthru
        _
    $region6: #{tpu_custom_call.1} parent=1 // loop_footer
      %s23 = sadd.s32 1, %s19
    $region7: #{tpu_custom_call.1} parent=1 // loop_footer_branch
      %18 = sbr.rel target = $region3
    $region8: #{tpu_custom_call.1} parent=1 // loop_exit
      _
    %436 = vsyncpa [#allocation3], 1
    %s437 = scalar_lea.sflag [#allocation3], 1
    %438 = vsyncpa %s437, 1
    %439 = vsyncpa [#allocation5], 1
    %s440 = scalar_lea.sflag [#allocation5], 1
    %441 = vsyncpa %s440, 1

</llo_original>
